<compile_context>
chip_gen: v5e
topology: v5e:2x2
jax: 0.10.0
libtpu: 0.0.40
codegen_flags: <defaults>
</compile_context>

<pallas_src>
import functools

import jax
import jax.numpy as jnp
from jax.experimental import pallas as pl
from jax.experimental.pallas import tpu as pltpu


def _round_up(n, m):
    return ((n + m - 1) // m) * m


def _default_fc2_on_mxu():
    """fc2 on the MXU for v6e/v7x; keep it on the VPU for v5 and older."""
    try:
        kind = jax.devices()[0].device_kind.lower()
    except Exception:
        return True
    return not any(tag in kind for tag in ("v2", "v3", "v4", "v5"))


def _vmem_limit_bytes():
    """Generation-aware VMEM limit (v5e/v6e: 128 MiB physical, v7x: 64 MiB)."""
    try:
        phys = int(pltpu.get_tpu_info().vmem_capacity_bytes)
    except Exception:
        phys = 64 * 1024 * 1024
    return max(32 * 1024 * 1024, min(phys - 16 * 1024 * 1024, 100 * 1024 * 1024))


def _mlp2_kernel(x_ref, w1_ref, b1_ref, w2_ref, b2_ref, o_ref, *, fc2_on_mxu):
    # In-kernel f32 -> bf16 cast of the streamed x tile (no wrapper-side HBM pass).
    x_bf = x_ref[...].astype(jnp.bfloat16)
    # fc1 on the MXU: bf16 operands, f32 accumulation.
    h = jnp.dot(x_bf, w1_ref[...], preferred_element_type=jnp.float32)
    # Bias + ReLU on the VPU in f32.
    h = jnp.maximum(h + b1_ref[...], 0.0)
    b2 = b2_ref[0, 0]  # scalar from SMEM
    if fc2_on_mxu:
        # v6e/v7x: MXU has slack after the tiny K=32 fc1 pass; removes the VPU
        # mul + cross-lane reduce that was the binding (VALU) work.
        y = jnp.dot(h.astype(jnp.bfloat16), w2_ref[...],
                    preferred_element_type=jnp.float32)          # (TB, 1)
    else:
        # v5e and older: keep fc2 as an f32 VPU multiply + lane reduce.
        y = jnp.sum(h * w2_ref[...], axis=-1, keepdims=True)     # (TB, 1)
    o_ref[...] = (y + b2).astype(o_ref.dtype)


def classifier_2l_d_forward(x, w1, b1, w2, b2, *, tb=4096, fc2_on_mxu=None):
    """Forward of classifier_2L_d (inference).

    x:  (B, D) float32 input (cast to bf16 inside the kernel)
    w1: (D, H) float32 fc1 weight (transposed vs PyTorch's (H, D))
    b1: (1, H) float32 fc1 bias
    w2: (1, H) float32 fc2 weight (PyTorch layout)
    b2: (1, 1) float32 fc2 bias
    returns (B, 1) float32
    """
    B, D = x.shape
    H = w1.shape[1]
    assert w1.shape == (D, H) and b1.shape == (1, H)
    assert w2.shape == (1, H) and b2.shape == (1, 1)

    if fc2_on_mxu is None:
        fc2_on_mxu = _default_fc2_on_mxu()

    # Weight-only casts/reshapes are O(D*H) (tiny); x itself is untouched here.
    w1_lo = w1.astype(jnp.bfloat16)
    if fc2_on_mxu:
        w2_k = w2.reshape(H, 1).astype(jnp.bfloat16)        # (H, 1) bf16 for the MXU
        w2_spec = pl.BlockSpec((H, 1), lambda i: (0, 0))
    else:
        w2_k = w2                                           # (1, H) f32 for the VPU
        w2_spec = pl.BlockSpec((1, H), lambda i: (0, 0))

    vmem_limit = _vmem_limit_bytes()

    # Batch tile: as large as comfortably fits VMEM (amortizes the ~0.35us per
    # grid-step overhead), multiple of 8 sublanes, capped at the batch size.
    bytes_per_row = (2 * D * 4          # x block (f32), double-buffered
                     + H * 4 + H * 2    # h (f32) + bf16 copy for the fc2 matmul
                     + 2 * 128 * 4)     # (TB,1) f32 out block lane-pads to 128, dbl-buffered
    budget = vmem_limit - 2 * 1024 * 1024
    tb_cap = max(8, (budget // (2 * bytes_per_row)) // 8 * 8)   # 2x slack for temps
    TB = max(8, (min(tb, tb_cap, _round_up(B, 8)) // 8) * 8)
    grid = (pl.cdiv(B, TB),)    # ragged last tile handled by Pallas masking

    flops = 2 * B * D * H + 2 * B * H
    bytes_accessed = (B * D * 4 + D * H * 2 + H * 4
                      + H * (2 if fc2_on_mxu else 4) + 4 + B * 4)

    kernel = functools.partial(_mlp2_kernel, fc2_on_mxu=fc2_on_mxu)

    return pl.pallas_call(
        kernel,
        out_shape=jax.ShapeDtypeStruct((B, 1), jnp.float32),
        grid_spec=pltpu.PrefetchScalarGridSpec(
            num_scalar_prefetch=0,
            grid=grid,
            in_specs=[
                pl.BlockSpec((TB, D), lambda i: (i, 0)),     # x tile: streamed (f32)
                pl.BlockSpec((D, H), lambda i: (0, 0)),      # w1: VMEM-resident
                pl.BlockSpec((1, H), lambda i: (0, 0)),      # b1: VMEM-resident
                w2_spec,                                     # w2: VMEM-resident
                pl.BlockSpec(memory_space=pltpu.MemorySpace.SMEM),  # b2: scalar path
            ],
            out_specs=pl.BlockSpec((TB, 1), lambda i: (i, 0)),
        ),
        compiler_params=pltpu.CompilerParams(
            dimension_semantics=("parallel",),     # megacore sharding on v7x
            vmem_limit_bytes=vmem_limit,
        ),
        cost_estimate=pl.CostEstimate(
            flops=flops, transcendentals=0, bytes_accessed=bytes_accessed),
    )(x, w1_lo, b1, w2_k, b2)


def init_params(key, input_shape, hidden_size):
    """Deterministic synthetic parameters matching nn.Linear init ranges.

    fc1 weight kept transposed as (D, H); fc2 weight as (1, H) (PyTorch layout)."""
    k1, k2, k3, k4 = jax.random.split(key, 4)
    bound1 = 1.0 / jnp.sqrt(input_shape)
    bound2 = 1.0 / jnp.sqrt(hidden_size)
    w1 = jax.random.uniform(k1, (input_shape, hidden_size), jnp.float32,
                            minval=-bound1, maxval=bound1)
    b1 = jax.random.uniform(k2, (1, hidden_size), jnp.float32,
                            minval=-bound1, maxval=bound1)
    w2 = jax.random.uniform(k3, (1, hidden_size), jnp.float32,
                            minval=-bound2, maxval=bound2)
    b2 = jax.random.uniform(k4, (1, 1), jnp.float32,
                            minval=-bound2, maxval=bound2)
    return w1, b1, w2, b2


if __name__ == "__main__":
    B = 32           # batch
    D = 32           # input_shape (features)
    H = 128          # hidden_size (small test size; module default is 512)

    key = jax.random.PRNGKey(0)
    kx, kp = jax.random.split(key)
    x = jax.random.normal(kx, (B, D), jnp.float32)
    w1, b1, w2, b2 = init_params(kp, D, H)

    fc2_on_mxu = _default_fc2_on_mxu()
    # Small tb so the self-test exercises a multi-step (pipelined) grid of 4.
    y = classifier_2l_d_forward(x, w1, b1, w2, b2, tb=8, fc2_on_mxu=fc2_on_mxu)
    y = jax.block_until_ready(y)
    assert y.shape == (B, 1)

    # Reference in plain JAX, emulating the in-kernel bf16 casts (f32 accumulate).
    x_bf = x.astype(jnp.bfloat16).astype(jnp.float32)
    w1_bf = w1.astype(jnp.bfloat16).astype(jnp.float32)
    h_ref = jnp.maximum(x_bf @ w1_bf + b1, 0.0)
    if fc2_on_mxu:
        h_ref = h_ref.astype(jnp.bfloat16).astype(jnp.float32)
        w2_emul = w2.astype(jnp.bfloat16).astype(jnp.float32)
    else:
        w2_emul = w2
    y_ref = h_ref @ w2_emul.T + b2
    assert jnp.allclose(y, y_ref, atol=2e-2, rtol=2e-2), (
        float(jnp.max(jnp.abs(y - y_ref))))

    print("KERNEL_OK")
</pallas_src>

<mosaic_0001>
module attributes {stable_mosaic.version = 11 : i64} {
  func.func @_mlp2_kernel(%arg0: i32, %arg1: memref<8x32xf32, #tpu.memory_space<vmem>>, %arg2: memref<32x128xbf16, #tpu.memory_space<vmem>>, %arg3: memref<1x128xf32, #tpu.memory_space<vmem>>, %arg4: memref<128x1xbf16, #tpu.memory_space<vmem>>, %arg5: memref<1x1xf32, #tpu.memory_space<smem>>, %arg6: memref<8x1xf32, #tpu.memory_space<vmem>>) attributes {dimension_semantics = [#tpu.dimension_semantics<parallel>], iteration_bounds = array<i64: 4>, scalar_prefetch = 0 : i64, scratch_operands = 0 : i64, tpu.core_type = #tpu.core_type<tc>, window_params = [{transform_indices = @transform_0, window_bounds = array<i64: 8, 32>}, {pipeline_mode = #tpu.pipeline_mode<synchronous>, transform_indices = @transform_1, window_bounds = array<i64: 32, 128>}, {pipeline_mode = #tpu.pipeline_mode<synchronous>, transform_indices = @transform_2, window_bounds = array<i64: 1, 128>}, {pipeline_mode = #tpu.pipeline_mode<synchronous>, transform_indices = @transform_3, window_bounds = array<i64: 128, 1>}, {transform_indices = @transform_4, window_bounds = array<i64: 1, 1>}, {transform_indices = @transform_5, window_bounds = array<i64: 8, 1>}]} {
    %c0 = arith.constant 0 : index
    %c0_0 = arith.constant 0 : index
    %0 = vector.load %arg1[%c0, %c0_0] : memref<8x32xf32, #tpu.memory_space<vmem>>, vector<8x32xf32>
    %1 = arith.truncf %0 : vector<8x32xf32> to vector<8x32xbf16>
    %c0_1 = arith.constant 0 : index
    %c0_2 = arith.constant 0 : index
    %2 = vector.load %arg2[%c0_1, %c0_2] : memref<32x128xbf16, #tpu.memory_space<vmem>>, vector<32x128xbf16>
    %cst = arith.constant dense<0.000000e+00> : vector<8x128xf32>
    %3 = tpu.matmul %1, %2, %cst {dimension_numbers = #tpu.dot_dimension_numbers<[1], [0], [0], [1], [0, 0, 1, 1], [], []>} : vector<8x32xbf16>, vector<32x128xbf16>, vector<8x128xf32> -> vector<8x128xf32>
    %c0_3 = arith.constant 0 : index
    %c0_4 = arith.constant 0 : index
    %4 = vector.load %arg3[%c0_3, %c0_4] : memref<1x128xf32, #tpu.memory_space<vmem>>, vector<1x128xf32>
    %5 = vector.broadcast %4 : vector<1x128xf32> to vector<8x128xf32>
    %6 = arith.addf %3, %5 : vector<8x128xf32>
    %cst_5 = arith.constant 0.000000e+00 : f32
    %7 = vector.broadcast %cst_5 : f32 to vector<8x128xf32>
    %8 = arith.maximumf %6, %7 : vector<8x128xf32>
    %c0_6 = arith.constant 0 : index
    %c0_7 = arith.constant 0 : index
    %9 = memref.load %arg5[%c0_6, %c0_7] : memref<1x1xf32, #tpu.memory_space<smem>>
    %10 = arith.truncf %8 : vector<8x128xf32> to vector<8x128xbf16>
    %c0_8 = arith.constant 0 : index
    %c0_9 = arith.constant 0 : index
    %11 = vector.load %arg4[%c0_8, %c0_9] : memref<128x1xbf16, #tpu.memory_space<vmem>>, vector<128x1xbf16>
    %cst_10 = arith.constant dense<0.000000e+00> : vector<8x1xf32>
    %12 = tpu.matmul %10, %11, %cst_10 {dimension_numbers = #tpu.dot_dimension_numbers<[1], [0], [0], [1], [0, 0, 1, 1], [], []>} : vector<8x128xbf16>, vector<128x1xbf16>, vector<8x1xf32> -> vector<8x1xf32>
    %13 = vector.broadcast %9 : f32 to vector<8x1xf32>
    %14 = arith.addf %12, %13 : vector<8x1xf32>
    %c0_11 = arith.constant 0 : index
    %c0_12 = arith.constant 0 : index
    %15 = vector.load %arg6[%c0_11, %c0_12] : memref<8x1xf32, #tpu.memory_space<vmem>>, vector<8x1xf32>
    tpu.vector_store %arg6[%c0_11, %c0_12], %14 {strides = array<i32>} : memref<8x1xf32, #tpu.memory_space<vmem>>, vector<8x1xf32>,
    return
  }
  func.func @transform_0(%arg0: i32) -> (i32, i32) {
    %c0_i32 = arith.constant 0 : i32
    %c0_i32_0 = arith.constant 0 : i32
    return %arg0, %c0_i32 : i32, i32
  }
  func.func @transform_1(%arg0: i32) -> (i32, i32) {
    %c0_i32 = arith.constant 0 : i32
    %c0_i32_0 = arith.constant 0 : i32
    %c0_i32_1 = arith.constant 0 : i32
    return %c0_i32, %c0_i32_0 : i32, i32
  }
  func.func @transform_2(%arg0: i32) -> (i32, i32) {
    %c0_i32 = arith.constant 0 : i32
    %c0_i32_0 = arith.constant 0 : i32
    %c0_i32_1 = arith.constant 0 : i32
    return %c0_i32, %c0_i32_0 : i32, i32
  }
  func.func @transform_3(%arg0: i32) -> (i32, i32) {
    %c0_i32 = arith.constant 0 : i32
    %c0_i32_0 = arith.constant 0 : i32
    %c0_i32_1 = arith.constant 0 : i32
    return %c0_i32, %c0_i32_0 : i32, i32
  }
  func.func @transform_4(%arg0: i32) -> (i32, i32) {
    %c0_i32 = arith.constant 0 : i32
    %c0_i32_0 = arith.constant 0 : i32
    %c0_i32_1 = arith.constant 0 : i32
    return %c0_i32, %c0_i32_0 : i32, i32
  }
  func.func @transform_5(%arg0: i32) -> (i32, i32) {
    %c0_i32 = arith.constant 0 : i32
    %c0_i32_0 = arith.constant 0 : i32
    return %arg0, %c0_i32 : i32, i32
  }
}

</mosaic_0001>

<llo_original>
// kernel: tpu_custom_call.1
$region0: #{tpu_custom_call.1}
  #allocation0 [shape = 'u32[]', space=smem, size = 0x4, offset = 0x4, fixed_abs, tag = 'smem constant byte address 0x4 - core index']
  #allocation1 [shape = 'u32[72,128]{1,0:T(1,128)}', space=vmem, size = 0x9000, scoped, tag = 'internal scratch']
  #allocation2 [shape = 'f32[1,1]{1,0:T(1,128)S(6)}', space=smem, size = 0x200, scoped, tag = 'scoped memory for tpu_custom_call.1']
  %s0 = inlined_call_operand.vmem [shape: f32[32,32], index: 0, kind: input, shape index: {}]
  %s1 = inlined_call_operand.vmem [shape: bf16[32,128], index: 1, kind: input, shape index: {}]
  %s2 = inlined_call_operand.vmem [shape: f32[1,128], index: 2, kind: input, shape index: {}]
  %s3 = inlined_call_operand.vmem [shape: bf16[128,1], index: 3, kind: input, shape index: {}]
  %s4 = inlined_call_operand.<no memory space> [shape: f32[1,1], index: 4, kind: input, shape index: {}]
  %s5 = inlined_call_operand.vmem [shape: f32[32,1], index: 5, kind: output, shape index: {}]
  %s6 = sld [smem:[#allocation0]]
  $region53: #{tpu_custom_call.1} parent=0
    _
  %s8 = ssub.s32 1, %s6
  %s9 = scalar_select 0, %s8, %s6
  %10 = sst [smem:[#allocation2]] %s4
  loop: start=0, step=1, limit=6
  $region2: #{tpu_custom_call.1} parent=0 // loop_pre_header
    _
  $region3: #{tpu_custom_call.1} parent=0 // loop_header
    %s12 = sphi 0, %s16
    %p13 = scmp.ge.s32.totalorder %s12, 6
    %s22 = sphi 0, %s24
    %s25 = sphi 0, %s22
    %s26 = sphi 0, %s25
    %s42 = sphi 0, %s26
    %s46 = sphi 0, %s46
    %s48 = sphi 0, %s46
    %s49 = sphi 0, %s48
    %s63 = sphi 0, %s49
    %s67 = sphi 0, %s67
    %s69 = sphi 0, %s67
    %s70 = sphi 0, %s69
    %s84 = sphi 0, %s70
    %s88 = sphi 0, %s88
    %s90 = sphi 0, %s88
    %s91 = sphi 0, %s90
    %s105 = sphi 0, %s91
    %s109 = sphi 0, %s109
    %s111 = sphi 0, %s109
    %s112 = sphi 0, %s111
    %s126 = sphi 0, %s112
    %s132 = sphi 0, %s134
    %s135 = sphi 0, %s132
    %s136 = sphi 0, %s135
    %s152 = sphi 0, %s136
  $region4: #{tpu_custom_call.1} parent=0 // loop_header_branch
    %15 = sbr.rel (%p13) target = $region8
  $region5: #{tpu_custom_call.1} parent=0 // loop_body
    %s17 = ssub.s32 %s12, 1
    %s18 = ssub.s32 %s12, 2
    %s19 = sadd.s32 %s12, 1
    %s20 = ssub.s32 %s12, %s19
    %p21 = scmp.eq.s32.totalorder %s20, 0
    %s23 = sadd.s32 %s22, 1
    %s24 = scalar_select %p21, %s22, %s23
    %p27 = pneg %p21
    %p28 = scmp.eq.s32.totalorder %s12, 3
    %p29 = por %p27, %p28
    %p30 = scmp.ne.s32.totalorder %s22, %s25
    %p31 = scmp.eq.s32.totalorder %s12, 0
    %p32 = por %p30, %p31
    %p33 = scmp.ne.s32.totalorder %s22, %s25
    %p34 = scmp.eq.s32.totalorder %s17, 3
    %p35 = por %p33, %p34
    %p36 = scmp.ne.s32.totalorder %s25, %s26
    %p37 = scmp.eq.s32.totalorder %s17, 0
    %p38 = por %p36, %p37
    %p39 = scmp.ne.s32.totalorder %s25, %s26
    %p40 = scmp.eq.s32.totalorder %s18, 3
    %p41 = por %p39, %p40
    %p43 = scmp.ne.s32.totalorder %s26, %s42
    %p44 = scmp.eq.s32.totalorder %s18, 0
    %p45 = por %p43, %p44
    %s47 = sadd.s32 %s46, 1
    %p50 = scmp.eq.s32.totalorder %s12, 3
    %p51 = scmp.ne.s32.totalorder %s46, %s48
    %p52 = scmp.eq.s32.totalorder %s12, 0
    %p53 = por %p51, %p52
    %p54 = scmp.ne.s32.totalorder %s46, %s48
    %p55 = scmp.eq.s32.totalorder %s17, 3
    %p56 = por %p54, %p55
    %p57 = scmp.ne.s32.totalorder %s48, %s49
    %p58 = scmp.eq.s32.totalorder %s17, 0
    %p59 = por %p57, %p58
    %p60 = scmp.ne.s32.totalorder %s48, %s49
    %p61 = scmp.eq.s32.totalorder %s18, 3
    %p62 = por %p60, %p61
    %p64 = scmp.ne.s32.totalorder %s49, %s63
    %p65 = scmp.eq.s32.totalorder %s18, 0
    %p66 = por %p64, %p65
    %s68 = sadd.s32 %s67, 1
    %p71 = scmp.eq.s32.totalorder %s12, 3
    %p72 = scmp.ne.s32.totalorder %s67, %s69
    %p73 = scmp.eq.s32.totalorder %s12, 0
    %p74 = por %p72, %p73
    %p75 = scmp.ne.s32.totalorder %s67, %s69
    %p76 = scmp.eq.s32.totalorder %s17, 3
    %p77 = por %p75, %p76
    %p78 = scmp.ne.s32.totalorder %s69, %s70
    %p79 = scmp.eq.s32.totalorder %s17, 0
    %p80 = por %p78, %p79
    %p81 = scmp.ne.s32.totalorder %s69, %s70
    %p82 = scmp.eq.s32.totalorder %s18, 3
    %p83 = por %p81, %p82
    %p85 = scmp.ne.s32.totalorder %s70, %s84
    %p86 = scmp.eq.s32.totalorder %s18, 0
    %p87 = por %p85, %p86
    %s89 = sadd.s32 %s88, 1
    %p92 = scmp.eq.s32.totalorder %s12, 3
    %p93 = scmp.ne.s32.totalorder %s88, %s90
    %p94 = scmp.eq.s32.totalorder %s12, 0
    %p95 = por %p93, %p94
    %p96 = scmp.ne.s32.totalorder %s88, %s90
    %p97 = scmp.eq.s32.totalorder %s17, 3
    %p98 = por %p96, %p97
    %p99 = scmp.ne.s32.totalorder %s90, %s91
    %p100 = scmp.eq.s32.totalorder %s17, 0
    %p101 = por %p99, %p100
    %p102 = scmp.ne.s32.totalorder %s90, %s91
    %p103 = scmp.eq.s32.totalorder %s18, 3
    %p104 = por %p102, %p103
    %p106 = scmp.ne.s32.totalorder %s91, %s105
    %p107 = scmp.eq.s32.totalorder %s18, 0
    %p108 = por %p106, %p107
    %s110 = sadd.s32 %s109, 1
    %p113 = scmp.eq.s32.totalorder %s12, 3
    %p114 = scmp.ne.s32.totalorder %s109, %s111
    %p115 = scmp.eq.s32.totalorder %s12, 0
    %p116 = por %p114, %p115
    %p117 = scmp.ne.s32.totalorder %s109, %s111
    %p118 = scmp.eq.s32.totalorder %s17, 3
    %p119 = por %p117, %p118
    %p120 = scmp.ne.s32.totalorder %s111, %s112
    %p121 = scmp.eq.s32.totalorder %s17, 0
    %p122 = por %p120, %p121
    %p123 = scmp.ne.s32.totalorder %s111, %s112
    %p124 = scmp.eq.s32.totalorder %s18, 3
    %p125 = por %p123, %p124
    %p127 = scmp.ne.s32.totalorder %s112, %s126
    %p128 = scmp.eq.s32.totalorder %s18, 0
    %p129 = por %p127, %p128
    %s130 = ssub.s32 %s12, %s19
    %p131 = scmp.eq.s32.totalorder %s130, 0
    %s133 = sadd.s32 %s132, 1
    %s134 = scalar_select %p131, %s132, %s133
    %p137 = pneg %p131
    %p138 = scmp.eq.s32.totalorder %s12, 3
    %p139 = por %p137, %p138
    %p140 = scmp.ne.s32.totalorder %s132, %s135
    %p141 = scmp.eq.s32.totalorder %s12, 0
    %p142 = por %p140, %p141
    %p143 = scmp.ne.s32.totalorder %s132, %s135
    %p144 = scmp.eq.s32.totalorder %s17, 3
    %p145 = por %p143, %p144
    %p146 = scmp.ne.s32.totalorder %s135, %s136
    %p147 = scmp.eq.s32.totalorder %s17, 0
    %p148 = por %p146, %p147
    %p149 = scmp.ne.s32.totalorder %s135, %s136
    %p150 = scmp.eq.s32.totalorder %s18, 3
    %p151 = por %p149, %p150
    %p153 = scmp.ne.s32.totalorder %s136, %s152
    %p154 = scmp.eq.s32.totalorder %s18, 0
    %p155 = por %p153, %p154
    %p156 = scmp.le.s32.totalorder 1, %s12
    %p157 = scmp.lt.s32.totalorder %s12, 5
    %p158 = pnand %p156, %p157
    %p159 = pneg %p158
    // Predicated region
    $region9: #{tpu_custom_call.1} parent=5 // pred_check
      _
    $region10: #{tpu_custom_call.1} parent=5 // pred_check_branch
      %161 = sbr.rel (%p158) target = $region12
    $region11: #{tpu_custom_call.1} parent=5 // pred_region
      %s162 = ssub.s32 %s12, 1
      // Predicated region
      $region13: #{tpu_custom_call.1} parent=11 // pred_check
        %p163 = pneg %p59
      $region14: #{tpu_custom_call.1} parent=11 // pred_check_branch
        %165 = sbr.rel (%p163) target = $region16
      $region15: #{tpu_custom_call.1} parent=11 // pred_region
        _
      $region16: #{tpu_custom_call.1} parent=11 // pred_fallthru
        _
      // Predicated region
      $region17: #{tpu_custom_call.1} parent=11 // pred_check
        %p166 = pneg %p80
      $region18: #{tpu_custom_call.1} parent=11 // pred_check_branch
        %168 = sbr.rel (%p166) target = $region20
      $region19: #{tpu_custom_call.1} parent=11 // pred_region
        _
      $region20: #{tpu_custom_call.1} parent=11 // pred_fallthru
        _
      // Predicated region
      $region21: #{tpu_custom_call.1} parent=11 // pred_check
        %p169 = pneg %p101
      $region22: #{tpu_custom_call.1} parent=11 // pred_check_branch
        %171 = sbr.rel (%p169) target = $region24
      $region23: #{tpu_custom_call.1} parent=11 // pred_region
        _
      $region24: #{tpu_custom_call.1} parent=11 // pred_fallthru
        _
      // Predicated region
      $region25: #{tpu_custom_call.1} parent=11 // pred_check
        %p172 = pneg %p122
      $region26: #{tpu_custom_call.1} parent=11 // pred_check_branch
        %174 = sbr.rel (%p172) target = $region28
      $region27: #{tpu_custom_call.1} parent=11 // pred_region
        _
      $region28: #{tpu_custom_call.1} parent=11 // pred_fallthru
        _
    $region12: #{tpu_custom_call.1} parent=5 // pred_fallthru
      _
    %p175 = scmp.lt.s32.totalorder %s12, 4
    // Predicated region
    $region29: #{tpu_custom_call.1} parent=5 // pred_check
      %p176 = pneg %p175
    $region30: #{tpu_custom_call.1} parent=5 // pred_check_branch
      %178 = sbr.rel (%p176) target = $region32
    $region31: #{tpu_custom_call.1} parent=5 // pred_region
      // Predicated region
      $region33: #{tpu_custom_call.1} parent=31 // pred_check
        %p179 = pneg %p32
      $region34: #{tpu_custom_call.1} parent=31 // pred_check_branch
        %181 = sbr.rel (%p179) target = $region36
      $region35: #{tpu_custom_call.1} parent=31 // pred_region
        %p182 = scmp.lt.s32.totalorder %s12, 3
        %s183 = scalar_select %p182, %s12, 3
        %s184 = smul.addr %s183, 8
        %s185 = scalar_lea.vmem %s0, %s184
      $region36: #{tpu_custom_call.1} parent=31 // pred_fallthru
        _
    $region32: #{tpu_custom_call.1} parent=5 // pred_fallthru
      _
    %p186 = scmp.le.s32.totalorder 1, %s12
    %p187 = scmp.lt.s32.totalorder %s12, 5
    %p188 = pnand %p186, %p187
    %p189 = pneg %p188
    // Predicated region
    $region37: #{tpu_custom_call.1} parent=5 // pred_check
      _
    $region38: #{tpu_custom_call.1} parent=5 // pred_check_branch
      %191 = sbr.rel (%p188) target = $region40
    $region39: #{tpu_custom_call.1} parent=5 // pred_region
      %s192 = ssub.s32 %s12, 1
      %p193 = scmp.lt.s32.totalorder %s17, 3
      %s194 = scalar_select %p193, %s17, 3
      %s195 = smul.addr %s194, 8
      %s196 = scalar_lea.vmem %s0, %s195
      %p197 = pneg %p38
      %p198 = pneg %p35
      %p199 = pneg %p59
      %p200 = pneg %p56
      %p201 = pneg %p80
      %p202 = pneg %p77
      %p203 = pneg %p101
      %p204 = pneg %p98
      %p205 = pneg %p122
      %p206 = pneg %p119
      %p207 = pneg %p148
      %p208 = pneg %p145
      %p209 = scmp.lt.s32.totalorder %s17, 3
      %s210 = scalar_select %p209, %s17, 3
      %s211 = smul.addr %s210, 8
      %s212 = scalar_lea.vmem %s5, %s211
      %p213 = scmp.lt.s32.totalorder %s17, 3
      %s214 = scalar_select %p213, %s17, 3
      %s215 = smul.addr %s214, 8
      %s216 = scalar_lea.vmem %s0, %s215
      %p217 = scmp.lt.s32.totalorder %s17, 3
      %s218 = scalar_select %p217, %s17, 3
      %s219 = smul.addr %s218, 8
      %s220 = scalar_lea.vmem %s5, %s219
      %v222 = vld [vmem:[%s216] sm:$0xff]
      %v223 = vpack.c.bf16 %v222, %v222
      %v224 = vld [vmem:[%s1] sm:$0xf]
      %v225 = vld [vmem:[%s1 + $0x4] sm:$0xf]
      %v226 = vld [vmem:[%s1 + $0x8] sm:$0xf]
      %v227 = vld [vmem:[%s1 + $0xc] sm:$0xf]
      %v228 = vld [vmem:[%s2] sm:$0x1]
      %v230 = vperm.slane %v228, 0
      %v236 = vunpack.c.l.b16 %v224
      %v237 = vunpack.c.l.b16 %v225
      %v238 = vunpack.c.l.b16 %v226
      %v239 = vunpack.c.l.b16 %v227
      %v240 = vpack.c.b16 %v237, %v236
      %v241 = vpack.c.b16 %v239, %v238
      %vm244 = vcmask 261120
      %v246 = vsel %vm244, %v223, 0
      %248 = vmatpush.bf16.msra.mxu0 0
      %249 = vmatpush.bf16.msra.mxu0 0
      %250 = vmatpush.bf16.msra.mxu0 0
      %251 = vmatpush.bf16.msra.mxu0 0
      %252 = vmatpush.bf16.msra.mxu0 0
      %253 = vmatpush.bf16.msra.mxu0 0
      %254 = vmatpush.bf16.msra.mxu0 %v241
      %255 = vmatpush.bf16.msra.mxu0 %v240
      %256 = vmatmul.bf16.gmra.mxu0 %v246
      %v257 = vpop.f32.mrf.mxu0
      %v258 = vadd.f32 %v230, %v257
      %v259 = vpop.f32.mrf.mxu0
      %260 = vdwg.mxu0
      %v261 = vmax.f32 %v258, 0.0
      %s262 = sld [smem:[#allocation2]]
      %v263 = vpack.c.bf16 %v261, %v261
      %v264 = vld [vmem:[%s3] sm:$0xf]
      %v265 = vld [vmem:[%s3 + $0x4] sm:$0xf]
      %v266 = vld [vmem:[%s3 + $0x8] sm:$0xf]
      %v267 = vld [vmem:[%s3 + $0xc] sm:$0xf]
      %v268 = vld [vmem:[%s3 + $0x10] sm:$0xf]
      %v269 = vld [vmem:[%s3 + $0x14] sm:$0xf]
      %v270 = vld [vmem:[%s3 + $0x18] sm:$0xf]
      %v271 = vld [vmem:[%s3 + $0x1c] sm:$0xf]
      %v272 = vld [vmem:[%s3 + $0x20] sm:$0xf]
      %v273 = vld [vmem:[%s3 + $0x24] sm:$0xf]
      %v274 = vld [vmem:[%s3 + $0x28] sm:$0xf]
      %v275 = vld [vmem:[%s3 + $0x2c] sm:$0xf]
      %v276 = vld [vmem:[%s3 + $0x30] sm:$0xf]
      %v277 = vld [vmem:[%s3 + $0x34] sm:$0xf]
      %v278 = vld [vmem:[%s3 + $0x38] sm:$0xf]
      %v279 = vld [vmem:[%s3 + $0x3c] sm:$0xf]
      %v280 = vstv %s262
      %v297 = vunpack.c.l.b16 %v264
      %v298 = vunpack.c.l.b16 %v265
      %v299 = vunpack.c.l.b16 %v266
      %v300 = vunpack.c.l.b16 %v267
      %v301 = vunpack.c.l.b16 %v268
      %v302 = vunpack.c.l.b16 %v269
      %v303 = vunpack.c.l.b16 %v270
      %v304 = vunpack.c.l.b16 %v271
      %v305 = vunpack.c.l.b16 %v272
      %v306 = vunpack.c.l.b16 %v273
      %v307 = vunpack.c.l.b16 %v274
      %v308 = vunpack.c.l.b16 %v275
      %v309 = vunpack.c.l.b16 %v276
      %v310 = vunpack.c.l.b16 %v277
      %v311 = vunpack.c.l.b16 %v278
      %v312 = vunpack.c.l.b16 %v279
      %v313 = vpack.c.b16 %v298, %v297
      %v314 = vpack.c.b16 %v300, %v299
      %v315 = vpack.c.b16 %v302, %v301
      %v316 = vpack.c.b16 %v304, %v303
      %v317 = vpack.c.b16 %v306, %v305
      %v318 = vpack.c.b16 %v308, %v307
      %v319 = vpack.c.b16 %v310, %v309
      %v320 = vpack.c.b16 %v312, %v311
      %329 = vmatpush.bf16.msra.mxu0 %v320
      %330 = vmatpush.bf16.msra.mxu0 %v319
      %331 = vmatpush.bf16.msra.mxu0 %v318
      %332 = vmatpush.bf16.msra.mxu0 %v317
      %333 = vmatpush.bf16.msra.mxu0 %v316
      %334 = vmatpush.bf16.msra.mxu0 %v315
      %335 = vmatpush.bf16.msra.mxu0 %v314
      %336 = vmatpush.bf16.msra.mxu0 %v313
      %337 = vmatmul.bf16.gmra.mxu0 %v263
      %v338 = vpop.f32.mrf.mxu0
      %v339 = vadd.f32 %v280, %v338
      %v340 = vpop.f32.mrf.mxu0
      %341 = vdwg.mxu0
      %vm342 = vcmask 7168
      %343 = vst.msk [vmem:[%s220] sm:$0xff] %vm342, %v339
      %p344 = scmp.lt.s32.totalorder %s17, 3
      %s345 = scalar_select %p344, %s17, 3
      %s346 = smul.addr %s345, 8
      %s347 = scalar_lea.vmem %s5, %s346
      // Predicated region
      $region41: #{tpu_custom_call.1} parent=39 // pred_check
        %p348 = pneg %p145
      $region42: #{tpu_custom_call.1} parent=39 // pred_check_branch
        %350 = sbr.rel (%p348) target = $region44
      $region43: #{tpu_custom_call.1} parent=39 // pred_region
        _
      $region44: #{tpu_custom_call.1} parent=39 // pred_fallthru
        _
    $region40: #{tpu_custom_call.1} parent=5 // pred_fallthru
      _
    %p351 = scmp.le.s32.totalorder 2, %s12
    // Predicated region
    $region45: #{tpu_custom_call.1} parent=5 // pred_check
      %p352 = pneg %p351
    $region46: #{tpu_custom_call.1} parent=5 // pred_check_branch
      %354 = sbr.rel (%p352) target = $region48
    $region47: #{tpu_custom_call.1} parent=5 // pred_region
      %s355 = ssub.s32 %s12, 2
      // Predicated region
      $region49: #{tpu_custom_call.1} parent=47 // pred_check
        %p356 = pneg %p151
      $region50: #{tpu_custom_call.1} parent=47 // pred_check_branch
        %358 = sbr.rel (%p356) target = $region52
      $region51: #{tpu_custom_call.1} parent=47 // pred_region
        %p359 = scmp.lt.s32.totalorder %s18, 3
        %s360 = scalar_select %p359, %s18, 3
        %s361 = smul.addr %s360, 8
        %s362 = scalar_lea.vmem %s5, %s361
      $region52: #{tpu_custom_call.1} parent=47 // pred_fallthru
        _
    $region48: #{tpu_custom_call.1} parent=5 // pred_fallthru
      _
  $region6: #{tpu_custom_call.1} parent=0 // loop_footer
    %s16 = sadd.s32 1, %s12
  $region7: #{tpu_custom_call.1} parent=0 // loop_footer_branch
    %11 = sbr.rel target = $region3
  $region8: #{tpu_custom_call.1} parent=0 // loop_exit
    _

</llo_original>
